<compile_context>
chip_gen: v7x
topology: tpu7x:2x2x1
jax: 0.10.0
libtpu: 0.0.40
codegen_flags: <defaults>
</compile_context>

<pallas_src>
import functools

import jax
import jax.numpy as jnp
from jax.experimental import pallas as pl
from jax.experimental.pallas import tpu as pltpu


def _round_up(x, m):
    return ((x + m - 1) // m) * m


def _make_kernel(n_inputs):
    """Build a kernel for `n_inputs` modality streams.

    Ref order: x_0..x_{n-1}, wf_0..wf_{n-1}, bf, w1, w2, out.
    """

    def kernel(*refs):
        x_refs = refs[:n_inputs]
        wf_refs = refs[n_inputs:2 * n_inputs]
        bf_ref, w1_ref, w2_ref, o_ref = refs[2 * n_inputs:]

        # fusion Linear, concat fused in: h = sum_i x_i @ Wf_i + bf  (f32 accumulator)
        h = bf_ref[...].astype(jnp.float32)                      # [1, H] -> broadcast
        for x_ref, wf_ref in zip(x_refs, wf_refs):
            h = h + jnp.dot(x_ref[...], wf_ref[...],
                            preferred_element_type=jnp.float32)  # [TM, H] f32

        # SENet: Linear(no bias) -> ReLU -> Linear(no bias) -> Sigmoid
        z = jnp.dot(h.astype(w1_ref.dtype), w1_ref[...],
                    preferred_element_type=jnp.float32)
        z = jnp.maximum(z, 0.0)
        z = jnp.dot(z.astype(w2_ref.dtype), w2_ref[...],
                    preferred_element_type=jnp.float32)
        gates = jax.nn.sigmoid(z)                                # f32 tail

        o_ref[...] = (h * gates).astype(o_ref.dtype)

    return kernel


def _pick_tm(batch):
    """Batch tile: small problems -> one tile; big problems -> 1024-row tiles.

    With MM=O(128), H=O(64), a 1024-row f32 tile is ~0.75 MiB of buffers
    (double-buffered ~1.5 MiB) -- comfortably within scoped VMEM on v5e/v6e and
    on v7x's halved 64 MiB VMEM; 1024 is a multiple of 256 for MXU occupancy.
    """
    if batch <= 1024:
        return _round_up(batch, 8)
    return 1024


def concat_dense_se(inputs, wf, bf, w1, w2):
    """inputs: list of [B, f_i] arrays; wf: [MM, H]; bf: [H]; w1: [H, R]; w2: [R, H]."""
    n = len(inputs)
    B = inputs[0].shape[0]
    feats = [x.shape[1] for x in inputs]
    MM = sum(feats)
    assert wf.shape[0] == MM
    H = wf.shape[1]
    R = w1.shape[1]
    out_dtype = inputs[0].dtype

    # Split the fusion weight per modality (wrapper-side slice; each slice is a
    # standalone array so its full dims satisfy the BlockSpec tiling rules).
    wf_slices = []
    off = 0
    for f in feats:
        wf_slices.append(wf[off:off + f, :])
        off += f

    bf2 = bf.reshape(1, H)

    # Batch tiling (pad batch to a multiple of the tile; padded rows are zeros
    # and are sliced off the output).
    TM = _pick_tm(B)
    Bp = _round_up(B, TM)
    if Bp != B:
        inputs = [jnp.pad(x, ((0, Bp - B), (0, 0))) for x in inputs]
    grid = (Bp // TM,)

    in_specs = (
        [pl.BlockSpec((TM, f), lambda i: (i, 0)) for f in feats]       # x_i tiles
        + [pl.BlockSpec((f, H), lambda i: (0, 0)) for f in feats]      # Wf_i resident
        + [pl.BlockSpec((1, H), lambda i: (0, 0)),                     # bf
           pl.BlockSpec((H, R), lambda i: (0, 0)),                     # SE squeeze
           pl.BlockSpec((R, H), lambda i: (0, 0))]                     # SE excite
    )
    out_specs = pl.BlockSpec((TM, H), lambda i: (i, 0))

    itemsize = jnp.dtype(out_dtype).itemsize
    cost = pl.CostEstimate(
        flops=2 * Bp * (MM * H + H * R + R * H),
        transcendentals=Bp * H,  # sigmoid
        bytes_accessed=(Bp * MM + Bp * H) * itemsize
        + (MM * H + H + H * R + R * H) * jnp.dtype(wf.dtype).itemsize,
    )

    out = pl.pallas_call(
        _make_kernel(n),
        out_shape=jax.ShapeDtypeStruct((Bp, H), out_dtype),
        grid=grid,
        in_specs=in_specs,
        out_specs=out_specs,
        compiler_params=pltpu.CompilerParams(
            dimension_semantics=("parallel",)),
        cost_estimate=cost,
    )(*inputs, *wf_slices, bf2, w1, w2)

    if Bp != B:
        out = out[:B]
    return out


def reference(inputs, wf, bf, w1, w2):
    x = jnp.concatenate(inputs, axis=1).astype(jnp.float32)
    h = x @ wf.astype(jnp.float32) + bf.astype(jnp.float32)
    g = jax.nn.sigmoid(jnp.maximum(h @ w1.astype(jnp.float32), 0.0)
                       @ w2.astype(jnp.float32))
    return h * g


if __name__ == "__main__":
    # Small shapes consistent with the module:
    #   two modality embeddings of dim 64 each -> multimodal_hidden_size = 128
    #   hidden_size = 64, se_ratio = 8 -> bottleneck = 8, batch = 8
    B = 8
    F1, F2 = 64, 64
    MM = F1 + F2
    H = 64
    RATIO = 8
    R = H // RATIO

    key = jax.random.PRNGKey(0)
    k1, k2, k3, k4, k5, k6 = jax.random.split(key, 6)

    # deterministic synthetic parameters (nn.Linear weights, pre-transposed to [in, out])
    wf = jax.random.normal(k1, (MM, H), jnp.float32) * 0.05
    bf = jax.random.normal(k2, (H,), jnp.float32) * 0.05
    w1 = jax.random.normal(k3, (H, R), jnp.float32) * 0.05   # SE squeeze, bias=False
    w2 = jax.random.normal(k4, (R, H), jnp.float32) * 0.05   # SE excite,  bias=False

    # example multimodal inputs
    in_a = jax.random.normal(k5, (B, F1), jnp.float32)
    in_b = jax.random.normal(k6, (B, F2), jnp.float32)
    inputs = [in_a, in_b]

    out = concat_dense_se(inputs, wf, bf, w1, w2)
    out = jax.block_until_ready(out)

    ref = reference(inputs, wf, bf, w1, w2)
    assert out.shape == (B, H)
    assert jnp.allclose(out, ref, atol=1e-5, rtol=1e-5), "mismatch vs reference"

    print("KERNEL_OK")
</pallas_src>

<mosaic_0001>
module attributes {stable_mosaic.version = 11 : i64} {
  func.func @kernel(%arg0: i32, %arg1: memref<8x64xf32, #tpu.memory_space<vmem>>, %arg2: memref<8x64xf32, #tpu.memory_space<vmem>>, %arg3: memref<64x64xf32, #tpu.memory_space<vmem>>, %arg4: memref<64x64xf32, #tpu.memory_space<vmem>>, %arg5: memref<1x64xf32, #tpu.memory_space<vmem>>, %arg6: memref<64x8xf32, #tpu.memory_space<vmem>>, %arg7: memref<8x64xf32, #tpu.memory_space<vmem>>, %arg8: memref<8x64xf32, #tpu.memory_space<vmem>>) attributes {dimension_semantics = [#tpu.dimension_semantics<parallel>], iteration_bounds = array<i64: 1>, scalar_prefetch = 0 : i64, scratch_operands = 0 : i64, tpu.core_type = #tpu.core_type<tc>, window_params = [{transform_indices = @transform_0, window_bounds = array<i64: 8, 64>}, {transform_indices = @transform_1, window_bounds = array<i64: 8, 64>}, {pipeline_mode = #tpu.pipeline_mode<synchronous>, transform_indices = @transform_2, window_bounds = array<i64: 64, 64>}, {pipeline_mode = #tpu.pipeline_mode<synchronous>, transform_indices = @transform_3, window_bounds = array<i64: 64, 64>}, {pipeline_mode = #tpu.pipeline_mode<synchronous>, transform_indices = @transform_4, window_bounds = array<i64: 1, 64>}, {pipeline_mode = #tpu.pipeline_mode<synchronous>, transform_indices = @transform_5, window_bounds = array<i64: 64, 8>}, {pipeline_mode = #tpu.pipeline_mode<synchronous>, transform_indices = @transform_6, window_bounds = array<i64: 8, 64>}, {transform_indices = @transform_7, window_bounds = array<i64: 8, 64>}]} {
    %c0 = arith.constant 0 : index
    %c0_0 = arith.constant 0 : index
    %0 = vector.load %arg5[%c0, %c0_0] : memref<1x64xf32, #tpu.memory_space<vmem>>, vector<1x64xf32>
    %c0_1 = arith.constant 0 : index
    %c0_2 = arith.constant 0 : index
    %1 = vector.load %arg1[%c0_1, %c0_2] : memref<8x64xf32, #tpu.memory_space<vmem>>, vector<8x64xf32>
    %c0_3 = arith.constant 0 : index
    %c0_4 = arith.constant 0 : index
    %2 = vector.load %arg3[%c0_3, %c0_4] : memref<64x64xf32, #tpu.memory_space<vmem>>, vector<64x64xf32>
    %cst = arith.constant dense<0.000000e+00> : vector<8x64xf32>
    %3 = tpu.matmul %1, %2, %cst {dimension_numbers = #tpu.dot_dimension_numbers<[1], [0], [0], [1], [0, 0, 1, 1], [], []>} : vector<8x64xf32>, vector<64x64xf32>, vector<8x64xf32> -> vector<8x64xf32>
    %4 = vector.broadcast %0 : vector<1x64xf32> to vector<8x64xf32>
    %5 = arith.addf %4, %3 : vector<8x64xf32>
    %c0_5 = arith.constant 0 : index
    %c0_6 = arith.constant 0 : index
    %6 = vector.load %arg2[%c0_5, %c0_6] : memref<8x64xf32, #tpu.memory_space<vmem>>, vector<8x64xf32>
    %c0_7 = arith.constant 0 : index
    %c0_8 = arith.constant 0 : index
    %7 = vector.load %arg4[%c0_7, %c0_8] : memref<64x64xf32, #tpu.memory_space<vmem>>, vector<64x64xf32>
    %cst_9 = arith.constant dense<0.000000e+00> : vector<8x64xf32>
    %8 = tpu.matmul %6, %7, %cst_9 {dimension_numbers = #tpu.dot_dimension_numbers<[1], [0], [0], [1], [0, 0, 1, 1], [], []>} : vector<8x64xf32>, vector<64x64xf32>, vector<8x64xf32> -> vector<8x64xf32>
    %9 = arith.addf %5, %8 : vector<8x64xf32>
    %c0_10 = arith.constant 0 : index
    %c0_11 = arith.constant 0 : index
    %10 = vector.load %arg6[%c0_10, %c0_11] : memref<64x8xf32, #tpu.memory_space<vmem>>, vector<64x8xf32>
    %cst_12 = arith.constant dense<0.000000e+00> : vector<8x8xf32>
    %11 = tpu.matmul %9, %10, %cst_12 {dimension_numbers = #tpu.dot_dimension_numbers<[1], [0], [0], [1], [0, 0, 1, 1], [], []>} : vector<8x64xf32>, vector<64x8xf32>, vector<8x8xf32> -> vector<8x8xf32>
    %cst_13 = arith.constant 0.000000e+00 : f32
    %12 = vector.broadcast %cst_13 : f32 to vector<8x8xf32>
    %13 = arith.maximumf %11, %12 : vector<8x8xf32>
    %c0_14 = arith.constant 0 : index
    %c0_15 = arith.constant 0 : index
    %14 = vector.load %arg7[%c0_14, %c0_15] : memref<8x64xf32, #tpu.memory_space<vmem>>, vector<8x64xf32>
    %cst_16 = arith.constant dense<0.000000e+00> : vector<8x64xf32>
    %15 = tpu.matmul %13, %14, %cst_16 {dimension_numbers = #tpu.dot_dimension_numbers<[1], [0], [0], [1], [0, 0, 1, 1], [], []>} : vector<8x8xf32>, vector<8x64xf32>, vector<8x64xf32> -> vector<8x64xf32>
    %16 = arith.negf %15 : vector<8x64xf32>
    %17 = math.exp %16 : vector<8x64xf32>
    %cst_17 = arith.constant 1.000000e+00 : f32
    %18 = vector.broadcast %cst_17 : f32 to vector<8x64xf32>
    %19 = arith.addf %18, %17 : vector<8x64xf32>
    %20 = arith.divf %18, %19 : vector<8x64xf32>
    %21 = arith.mulf %9, %20 : vector<8x64xf32>
    %c0_18 = arith.constant 0 : index
    %c0_19 = arith.constant 0 : index
    %22 = vector.load %arg8[%c0_18, %c0_19] : memref<8x64xf32, #tpu.memory_space<vmem>>, vector<8x64xf32>
    tpu.vector_store %arg8[%c0_18, %c0_19], %21 {strides = array<i32>} : memref<8x64xf32, #tpu.memory_space<vmem>>, vector<8x64xf32>,
    return
  }
  func.func @transform_0(%arg0: i32) -> (i32, i32) {
    %c0_i32 = arith.constant 0 : i32
    %c0_i32_0 = arith.constant 0 : i32
    return %arg0, %c0_i32 : i32, i32
  }
  func.func @transform_1(%arg0: i32) -> (i32, i32) {
    %c0_i32 = arith.constant 0 : i32
    %c0_i32_0 = arith.constant 0 : i32
    return %arg0, %c0_i32 : i32, i32
  }
  func.func @transform_2(%arg0: i32) -> (i32, i32) {
    %c0_i32 = arith.constant 0 : i32
    %c0_i32_0 = arith.constant 0 : i32
    %c0_i32_1 = arith.constant 0 : i32
    return %c0_i32, %c0_i32_0 : i32, i32
  }
  func.func @transform_3(%arg0: i32) -> (i32, i32) {
    %c0_i32 = arith.constant 0 : i32
    %c0_i32_0 = arith.constant 0 : i32
    %c0_i32_1 = arith.constant 0 : i32
    return %c0_i32, %c0_i32_0 : i32, i32
  }
  func.func @transform_4(%arg0: i32) -> (i32, i32) {
    %c0_i32 = arith.constant 0 : i32
    %c0_i32_0 = arith.constant 0 : i32
    %c0_i32_1 = arith.constant 0 : i32
    return %c0_i32, %c0_i32_0 : i32, i32
  }
  func.func @transform_5(%arg0: i32) -> (i32, i32) {
    %c0_i32 = arith.constant 0 : i32
    %c0_i32_0 = arith.constant 0 : i32
    %c0_i32_1 = arith.constant 0 : i32
    return %c0_i32, %c0_i32_0 : i32, i32
  }
  func.func @transform_6(%arg0: i32) -> (i32, i32) {
    %c0_i32 = arith.constant 0 : i32
    %c0_i32_0 = arith.constant 0 : i32
    %c0_i32_1 = arith.constant 0 : i32
    return %c0_i32, %c0_i32_0 : i32, i32
  }
  func.func @transform_7(%arg0: i32) -> (i32, i32) {
    %c0_i32 = arith.constant 0 : i32
    %c0_i32_0 = arith.constant 0 : i32
    return %arg0, %c0_i32 : i32, i32
  }
}

</mosaic_0001>

<llo_original>
// kernel: tpu_custom_call.1
$region0: #{tpu_custom_call.1}
  #allocation0 [shape = 'u32[]', space=smem, size = 0x4, offset = 0x4, fixed_abs, tag = 'smem constant byte address 0x4 - core index']
  #allocation1 [shape = 'u32[144,128]{1,0:T(1,128)}', space=vmem, size = 0x12000, scoped, tag = 'internal scratch']
  %s0 = inlined_call_operand.vmem [shape: f32[8,64], index: 0, kind: input, shape index: {}]
  %s1 = inlined_call_operand.hbm [shape: f32[8,64], index: 1, kind: input, shape index: {}]
  %s2 = inlined_call_operand.vmem [shape: f32[64,64], index: 2, kind: input, shape index: {}]
  %s3 = inlined_call_operand.hbm [shape: f32[64,64], index: 3, kind: input, shape index: {}]
  %s4 = inlined_call_operand.vmem [shape: f32[1,64], index: 4, kind: input, shape index: {}]
  %s5 = inlined_call_operand.vmem [shape: f32[64,8], index: 5, kind: input, shape index: {}]
  %s6 = inlined_call_operand.vmem [shape: f32[8,64], index: 6, kind: input, shape index: {}]
  %s7 = inlined_call_operand.hbm [shape: f32[8,64], index: 7, kind: output, shape index: {}]
  %s8 = sld [smem:[#allocation0]]
  $region46: #{tpu_custom_call.1} parent=0
    _
  %s10 = ssub.s32 1, %s8
  %s11 = scalar_select 0, %s10, %s8
  $region1: #{tpu_custom_call.1} parent=0
    #allocation2 [shape = 'u8[4096]{0}', space=vmem, size = 0x1000, scoped, tag = 'input window, operand 1, single buffered']
    #allocation3 [shape = 's32[1]{0}', space=sflag, size = 0x4, scoped, tag = 'scoped memory for tpu_custom_call.1']
    #allocation4 [shape = 's32[1]{0}', space=sflag, size = 0x4, scoped, tag = 'scoped memory for tpu_custom_call.1']
    #allocation5 [shape = 'u8[32768]{0}', space=vmem, size = 0x8000, scoped, tag = 'input window, operand 3, single buffered']
    #allocation6 [shape = 's32[1]{0}', space=sflag, size = 0x4, scoped, tag = 'scoped memory for tpu_custom_call.1']
    #allocation7 [shape = 'u8[4096]{0}', space=vmem, size = 0x1000, scoped, tag = 'output window, operand 0, single buffered']
    %12 = vsyncpa [#allocation3], 0
    %13 = vsyncpa [#allocation6], 0
    %14 = vsyncpa [#allocation4], 0
    // Predicated region
    $region2: #{tpu_custom_call.1} parent=1 // pred_check
      _
    $region3: #{tpu_custom_call.1} parent=1 // pred_check_branch
      %16 = sbr.rel (0) target = $region5
    $region4: #{tpu_custom_call.1} parent=1 // pred_region
      _
    $region5: #{tpu_custom_call.1} parent=1 // pred_fallthru
      _
    // Predicated region
    $region6: #{tpu_custom_call.1} parent=1 // pred_check
      _
    $region7: #{tpu_custom_call.1} parent=1 // pred_check_branch
      %18 = sbr.rel (0) target = $region9
    $region8: #{tpu_custom_call.1} parent=1 // pred_region
      %s20 = ssub.s32 128, 128
      %21 = vsyncadd [#allocation3], %s20
      %s23 = sshll.u32 [#allocation2], 4
      %s24 = int_to_ptr.vmem [resolvable:$true] %s23
      %26 = dma.hbm_to_vmem [thread:$0]  %s1, 128, %s24, [#allocation3]
    $region9: #{tpu_custom_call.1} parent=1 // pred_fallthru
      _
    // Predicated region
    $region10: #{tpu_custom_call.1} parent=1 // pred_check
      _
    $region11: #{tpu_custom_call.1} parent=1 // pred_check_branch
      %28 = sbr.rel (0) target = $region13
    $region12: #{tpu_custom_call.1} parent=1 // pred_region
      _
    $region13: #{tpu_custom_call.1} parent=1 // pred_fallthru
      _
    // Predicated region
    $region14: #{tpu_custom_call.1} parent=1 // pred_check
      _
    $region15: #{tpu_custom_call.1} parent=1 // pred_check_branch
      %30 = sbr.rel (0) target = $region17
    $region16: #{tpu_custom_call.1} parent=1 // pred_region
      %s32 = ssub.s32 1024, 1024
      %33 = vsyncadd [#allocation6], %s32
      %s34 = sshll.u32 [#allocation5], 4
      %s35 = int_to_ptr.vmem [resolvable:$true] %s34
      %40 = dma.hbm_to_vmem [thread:$0]  %s3, 1024, %s35, [#allocation6], 128, 128, 8
    $region17: #{tpu_custom_call.1} parent=1 // pred_fallthru
      _
    // Predicated region
    $region18: #{tpu_custom_call.1} parent=1 // pred_check
      _
    $region19: #{tpu_custom_call.1} parent=1 // pred_check_branch
      %42 = sbr.rel (0) target = $region21
    $region20: #{tpu_custom_call.1} parent=1 // pred_region
      _
    $region21: #{tpu_custom_call.1} parent=1 // pred_fallthru
      _
    // Predicated region
    $region22: #{tpu_custom_call.1} parent=1 // pred_check
      _
    $region23: #{tpu_custom_call.1} parent=1 // pred_check_branch
      %44 = sbr.rel (0) target = $region25
    $region24: #{tpu_custom_call.1} parent=1 // pred_region
      _
    $region25: #{tpu_custom_call.1} parent=1 // pred_fallthru
      _
    // Predicated region
    $region26: #{tpu_custom_call.1} parent=1 // pred_check
      _
    $region27: #{tpu_custom_call.1} parent=1 // pred_check_branch
      %46 = sbr.rel (0) target = $region29
    $region28: #{tpu_custom_call.1} parent=1 // pred_region
      _
    $region29: #{tpu_custom_call.1} parent=1 // pred_fallthru
      _
    // Predicated region
    $region30: #{tpu_custom_call.1} parent=1 // pred_check
      _
    $region31: #{tpu_custom_call.1} parent=1 // pred_check_branch
      %48 = sbr.rel (0) target = $region33
    $region32: #{tpu_custom_call.1} parent=1 // pred_region
      %49 = dma.done [#allocation3], 128
    $region33: #{tpu_custom_call.1} parent=1 // pred_fallthru
      _
    // Predicated region
    $region34: #{tpu_custom_call.1} parent=1 // pred_check
      _
    $region35: #{tpu_custom_call.1} parent=1 // pred_check_branch
      %51 = sbr.rel (0) target = $region37
    $region36: #{tpu_custom_call.1} parent=1 // pred_region
      %52 = dma.done [#allocation6], 1024
    $region37: #{tpu_custom_call.1} parent=1 // pred_fallthru
      _
    %v53 = vld [vmem:[%s4] sm:$0x1]
    %v54 = vld [vmem:[%s0] sm:$0xff]
    %v55 = vld [vmem:[%s2] sm:$0xff]
    %v56 = vld [vmem:[%s2 + $0x8] sm:$0xff]
    %v57 = vld [vmem:[%s2 + $0x10] sm:$0xff]
    %v58 = vld [vmem:[%s2 + $0x18] sm:$0xff]
    %v59 = vld [vmem:[%s2 + $0x20] sm:$0xff]
    %v60 = vld [vmem:[%s2 + $0x28] sm:$0xff]
    %v61 = vld [vmem:[%s2 + $0x30] sm:$0xff]
    %v62 = vld [vmem:[%s2 + $0x38] sm:$0xff]
    %vm63 = vcmask 523264
    %v65 = vsel %vm63, %v54, 0
    %67 = vmatprep.subr.mxu0 0.0
    %68 = vmatpush1.msra.mxu0 %v55
    %69 = vmatprep.subr.mxu0 0.0
    %70 = vmatpush1.msra.mxu0 %v56
    %71 = vmatprep.subr.mxu0 0.0
    %72 = vmatpush1.msra.mxu0 %v57
    %73 = vmatprep.subr.mxu0 0.0
    %74 = vmatpush1.msra.mxu0 %v58
    %75 = vmatprep.subr.mxu0 0.0
    %76 = vmatpush1.msra.mxu0 %v59
    %77 = vmatprep.subr.mxu0 0.0
    %78 = vmatpush1.msra.mxu0 %v60
    %79 = vmatprep.subr.mxu0 0.0
    %80 = vmatpush1.msra.mxu0 %v61
    %81 = vmatprep.subr.mxu0 0.0
    %82 = vmatpush1.msra.mxu0 %v62
    %83 = vmatprep.subr.mxu0 0.0
    %84 = vmatpush1.msra.mxu0 0.0
    %85 = vmatprep.subr.mxu0 0.0
    %86 = vmatpush1.msra.mxu0 0.0
    %87 = vmatprep.subr.mxu0 0.0
    %88 = vmatpush1.msra.mxu0 0.0
    %89 = vmatprep.subr.mxu0 0.0
    %90 = vmatpush1.msra.mxu0 0.0
    %91 = vmatprep.subr.mxu0 0.0
    %92 = vmatpush1.msra.mxu0 0.0
    %93 = vmatprep.subr.mxu0 0.0
    %94 = vmatpush1.msra.mxu0 0.0
    %95 = vmatprep.subr.mxu0 0.0
    %96 = vmatpush1.msra.mxu0 0.0
    %97 = vmatprep.subr.mxu0 0.0
    %98 = vmatpush1.msra.mxu0 0.0
    %99 = vmatprep.subr.mxu0 0.0
    %100 = vmatpush1.msra.mxu0 0.0
    %101 = vmatprep.subr.mxu0 0.0
    %102 = vmatpush1.msra.mxu0 0.0
    %103 = vmatprep.subr.mxu0 0.0
    %104 = vmatpush1.msra.mxu0 0.0
    %105 = vmatprep.subr.mxu0 0.0
    %106 = vmatpush1.msra.mxu0 0.0
    %107 = vmatprep.subr.mxu0 0.0
    %108 = vmatpush1.msra.mxu0 0.0
    %109 = vmatprep.subr.mxu0 0.0
    %110 = vmatpush1.msra.mxu0 0.0
    %111 = vmatprep.subr.mxu0 0.0
    %112 = vmatpush1.msra.mxu0 0.0
    %113 = vmatprep.subr.mxu0 0.0
    %114 = vmatpush1.msra.mxu0 0.0
    %115 = vmatprep.subr.mxu0 0.0
    %116 = vmatpush1.msra.mxu0 0.0
    %117 = vmatprep.subr.mxu0 0.0
    %118 = vmatpush1.msra.mxu0 0.0
    %119 = vmatprep.subr.mxu0 0.0
    %120 = vmatpush1.msra.mxu0 0.0
    %121 = vmatprep.subr.mxu0 0.0
    %122 = vmatpush1.msra.mxu0 0.0
    %123 = vmatprep.subr.mxu0 0.0
    %124 = vmatpush1.msra.mxu0 0.0
    %125 = vmatprep.subr.mxu0 0.0
    %126 = vmatpush1.msra.mxu0 0.0
    %127 = vmatprep.subr.mxu0 0.0
    %128 = vmatpush1.msra.mxu0 0.0
    %129 = vmatprep.subr.mxu0 0.0
    %130 = vmatpush1.msra.mxu0 0.0
    %131 = vmatprep.mubr.f32.mxu0 0.0
    %132 = vmatmul.mubr.f32.gmra.mrb[0].mxu0 %v65
    %v133 = vpop.f32.mrb[0].mxu0
    %v134 = vadd.f32 0.0, %v133
    %v135 = vpop.f32.mrb[0].mxu0
    %136 = vdwg.mxu0
    %v138 = vlaneseq
    %v139 = vshrl.u32 %v138, 7
    %v140 = vsub.s32 0, %v139
    %v141 = vrot.slane %v53, %v140
    %v143 = vadd.f32 %v141, %v134
    %v144 = vld [vmem:[#allocation2] sm:$0xff]
    %v145 = vld [vmem:[#allocation5] sm:$0xff]
    %v146 = vld [vmem:[#allocation5 + $0x8] sm:$0xff]
    %v147 = vld [vmem:[#allocation5 + $0x10] sm:$0xff]
    %v148 = vld [vmem:[#allocation5 + $0x18] sm:$0xff]
    %v149 = vld [vmem:[#allocation5 + $0x20] sm:$0xff]
    %v150 = vld [vmem:[#allocation5 + $0x28] sm:$0xff]
    %v151 = vld [vmem:[#allocation5 + $0x30] sm:$0xff]
    %v152 = vld [vmem:[#allocation5 + $0x38] sm:$0xff]
    %v154 = vsel %vm63, %v144, 0
    %156 = vmatprep.subr.mxu0 0.0
    %157 = vmatpush1.msra.mxu0 %v145
    %158 = vmatprep.subr.mxu0 0.0
    %159 = vmatpush1.msra.mxu0 %v146
    %160 = vmatprep.subr.mxu0 0.0
    %161 = vmatpush1.msra.mxu0 %v147
    %162 = vmatprep.subr.mxu0 0.0
    %163 = vmatpush1.msra.mxu0 %v148
    %164 = vmatprep.subr.mxu0 0.0
    %165 = vmatpush1.msra.mxu0 %v149
    %166 = vmatprep.subr.mxu0 0.0
    %167 = vmatpush1.msra.mxu0 %v150
    %168 = vmatprep.subr.mxu0 0.0
    %169 = vmatpush1.msra.mxu0 %v151
    %170 = vmatprep.subr.mxu0 0.0
    %171 = vmatpush1.msra.mxu0 %v152
    %172 = vmatprep.subr.mxu0 0.0
    %173 = vmatpush1.msra.mxu0 0.0
    %174 = vmatprep.subr.mxu0 0.0
    %175 = vmatpush1.msra.mxu0 0.0
    %176 = vmatprep.subr.mxu0 0.0
    %177 = vmatpush1.msra.mxu0 0.0
    %178 = vmatprep.subr.mxu0 0.0
    %179 = vmatpush1.msra.mxu0 0.0
    %180 = vmatprep.subr.mxu0 0.0
    %181 = vmatpush1.msra.mxu0 0.0
    %182 = vmatprep.subr.mxu0 0.0
    %183 = vmatpush1.msra.mxu0 0.0
    %184 = vmatprep.subr.mxu0 0.0
    %185 = vmatpush1.msra.mxu0 0.0
    %186 = vmatprep.subr.mxu0 0.0
    %187 = vmatpush1.msra.mxu0 0.0
    %188 = vmatprep.subr.mxu0 0.0
    %189 = vmatpush1.msra.mxu0 0.0
    %190 = vmatprep.subr.mxu0 0.0
    %191 = vmatpush1.msra.mxu0 0.0
    %192 = vmatprep.subr.mxu0 0.0
    %193 = vmatpush1.msra.mxu0 0.0
    %194 = vmatprep.subr.mxu0 0.0
    %195 = vmatpush1.msra.mxu0 0.0
    %196 = vmatprep.subr.mxu0 0.0
    %197 = vmatpush1.msra.mxu0 0.0
    %198 = vmatprep.subr.mxu0 0.0
    %199 = vmatpush1.msra.mxu0 0.0
    %200 = vmatprep.subr.mxu0 0.0
    %201 = vmatpush1.msra.mxu0 0.0
    %202 = vmatprep.subr.mxu0 0.0
    %203 = vmatpush1.msra.mxu0 0.0
    %204 = vmatprep.subr.mxu0 0.0
    %205 = vmatpush1.msra.mxu0 0.0
    %206 = vmatprep.subr.mxu0 0.0
    %207 = vmatpush1.msra.mxu0 0.0
    %208 = vmatprep.subr.mxu0 0.0
    %209 = vmatpush1.msra.mxu0 0.0
    %210 = vmatprep.subr.mxu0 0.0
    %211 = vmatpush1.msra.mxu0 0.0
    %212 = vmatprep.subr.mxu0 0.0
    %213 = vmatpush1.msra.mxu0 0.0
    %214 = vmatprep.subr.mxu0 0.0
    %215 = vmatpush1.msra.mxu0 0.0
    %216 = vmatprep.subr.mxu0 0.0
    %217 = vmatpush1.msra.mxu0 0.0
    %218 = vmatprep.subr.mxu0 0.0
    %219 = vmatpush1.msra.mxu0 0.0
    %220 = vmatprep.mubr.f32.mxu0 0.0
    %221 = vmatmul.mubr.f32.gmra.mrb[0].mxu0 %v154
    %v222 = vpop.f32.mrb[0].mxu0
    %v223 = vadd.f32 0.0, %v222
    %v224 = vpop.f32.mrb[0].mxu0
    %225 = vdwg.mxu0
    %v226 = vadd.f32 %v143, %v223
    %v227 = vld [vmem:[%s5] sm:$0xff]
    %v228 = vld [vmem:[%s5 + $0x8] sm:$0xff]
    %v229 = vld [vmem:[%s5 + $0x10] sm:$0xff]
    %v230 = vld [vmem:[%s5 + $0x18] sm:$0xff]
    %v231 = vld [vmem:[%s5 + $0x20] sm:$0xff]
    %v232 = vld [vmem:[%s5 + $0x28] sm:$0xff]
    %v233 = vld [vmem:[%s5 + $0x30] sm:$0xff]
    %v234 = vld [vmem:[%s5 + $0x38] sm:$0xff]
    %v236 = vsel %vm63, %v226, 0
    %238 = vmatprep.subr.mxu0 0.0
    %239 = vmatpush1.msra.mxu0 %v227
    %240 = vmatprep.subr.mxu0 0.0
    %241 = vmatpush1.msra.mxu0 %v228
    %242 = vmatprep.subr.mxu0 0.0
    %243 = vmatpush1.msra.mxu0 %v229
    %244 = vmatprep.subr.mxu0 0.0
    %245 = vmatpush1.msra.mxu0 %v230
    %246 = vmatprep.subr.mxu0 0.0
    %247 = vmatpush1.msra.mxu0 %v231
    %248 = vmatprep.subr.mxu0 0.0
    %249 = vmatpush1.msra.mxu0 %v232
    %250 = vmatprep.subr.mxu0 0.0
    %251 = vmatpush1.msra.mxu0 %v233
    %252 = vmatprep.subr.mxu0 0.0
    %253 = vmatpush1.msra.mxu0 %v234
    %254 = vmatprep.subr.mxu0 0.0
    %255 = vmatpush1.msra.mxu0 0.0
    %256 = vmatprep.subr.mxu0 0.0
    %257 = vmatpush1.msra.mxu0 0.0
    %258 = vmatprep.subr.mxu0 0.0
    %259 = vmatpush1.msra.mxu0 0.0
    %260 = vmatprep.subr.mxu0 0.0
    %261 = vmatpush1.msra.mxu0 0.0
    %262 = vmatprep.subr.mxu0 0.0
    %263 = vmatpush1.msra.mxu0 0.0
    %264 = vmatprep.subr.mxu0 0.0
    %265 = vmatpush1.msra.mxu0 0.0
    %266 = vmatprep.subr.mxu0 0.0
    %267 = vmatpush1.msra.mxu0 0.0
    %268 = vmatprep.subr.mxu0 0.0
    %269 = vmatpush1.msra.mxu0 0.0
    %270 = vmatprep.subr.mxu0 0.0
    %271 = vmatpush1.msra.mxu0 0.0
    %272 = vmatprep.subr.mxu0 0.0
    %273 = vmatpush1.msra.mxu0 0.0
    %274 = vmatprep.subr.mxu0 0.0
    %275 = vmatpush1.msra.mxu0 0.0
    %276 = vmatprep.subr.mxu0 0.0
    %277 = vmatpush1.msra.mxu0 0.0
    %278 = vmatprep.subr.mxu0 0.0
    %279 = vmatpush1.msra.mxu0 0.0
    %280 = vmatprep.subr.mxu0 0.0
    %281 = vmatpush1.msra.mxu0 0.0
    %282 = vmatprep.subr.mxu0 0.0
    %283 = vmatpush1.msra.mxu0 0.0
    %284 = vmatprep.subr.mxu0 0.0
    %285 = vmatpush1.msra.mxu0 0.0
    %286 = vmatprep.subr.mxu0 0.0
    %287 = vmatpush1.msra.mxu0 0.0
    %288 = vmatprep.subr.mxu0 0.0
    %289 = vmatpush1.msra.mxu0 0.0
    %290 = vmatprep.subr.mxu0 0.0
    %291 = vmatpush1.msra.mxu0 0.0
    %292 = vmatprep.subr.mxu0 0.0
    %293 = vmatpush1.msra.mxu0 0.0
    %294 = vmatprep.subr.mxu0 0.0
    %295 = vmatpush1.msra.mxu0 0.0
    %296 = vmatprep.subr.mxu0 0.0
    %297 = vmatpush1.msra.mxu0 0.0
    %298 = vmatprep.subr.mxu0 0.0
    %299 = vmatpush1.msra.mxu0 0.0
    %300 = vmatprep.subr.mxu0 0.0
    %301 = vmatpush1.msra.mxu0 0.0
    %302 = vmatprep.mubr.f32.mxu0 0.0
    %303 = vmatmul.mubr.f32.gmra.mrb[0].mxu0 %v236
    %v304 = vpop.f32.mrb[0].mxu0
    %v305 = vadd.f32 0.0, %v304
    %v306 = vpop.f32.mrb[0].mxu0
    %307 = vdwg.mxu0
    %v308 = vmax.f32 %v305, 0.0
    %v309 = vld [vmem:[%s6] sm:$0xff]
    %vm310 = vcmask 64512
    %v312 = vsel %vm310, %v308, 0
    %314 = vmatprep.subr.mxu0 0.0
    %315 = vmatpush1.msra.mxu0 %v309
    %316 = vmatprep.subr.mxu0 0.0
    %317 = vmatpush1.msra.mxu0 0.0
    %318 = vmatprep.subr.mxu0 0.0
    %319 = vmatpush1.msra.mxu0 0.0
    %320 = vmatprep.subr.mxu0 0.0
    %321 = vmatpush1.msra.mxu0 0.0
    %322 = vmatprep.subr.mxu0 0.0
    %323 = vmatpush1.msra.mxu0 0.0
    %324 = vmatprep.subr.mxu0 0.0
    %325 = vmatpush1.msra.mxu0 0.0
    %326 = vmatprep.subr.mxu0 0.0
    %327 = vmatpush1.msra.mxu0 0.0
    %328 = vmatprep.subr.mxu0 0.0
    %329 = vmatpush1.msra.mxu0 0.0
    %330 = vmatprep.subr.mxu0 0.0
    %331 = vmatpush1.msra.mxu0 0.0
    %332 = vmatprep.subr.mxu0 0.0
    %333 = vmatpush1.msra.mxu0 0.0
    %334 = vmatprep.subr.mxu0 0.0
    %335 = vmatpush1.msra.mxu0 0.0
    %336 = vmatprep.subr.mxu0 0.0
    %337 = vmatpush1.msra.mxu0 0.0
    %338 = vmatprep.subr.mxu0 0.0
    %339 = vmatpush1.msra.mxu0 0.0
    %340 = vmatprep.subr.mxu0 0.0
    %341 = vmatpush1.msra.mxu0 0.0
    %342 = vmatprep.subr.mxu0 0.0
    %343 = vmatpush1.msra.mxu0 0.0
    %344 = vmatprep.subr.mxu0 0.0
    %345 = vmatpush1.msra.mxu0 0.0
    %346 = vmatprep.subr.mxu0 0.0
    %347 = vmatpush1.msra.mxu0 0.0
    %348 = vmatprep.subr.mxu0 0.0
    %349 = vmatpush1.msra.mxu0 0.0
    %350 = vmatprep.subr.mxu0 0.0
    %351 = vmatpush1.msra.mxu0 0.0
    %352 = vmatprep.subr.mxu0 0.0
    %353 = vmatpush1.msra.mxu0 0.0
    %354 = vmatprep.subr.mxu0 0.0
    %355 = vmatpush1.msra.mxu0 0.0
    %356 = vmatprep.subr.mxu0 0.0
    %357 = vmatpush1.msra.mxu0 0.0
    %358 = vmatprep.subr.mxu0 0.0
    %359 = vmatpush1.msra.mxu0 0.0
    %360 = vmatprep.subr.mxu0 0.0
    %361 = vmatpush1.msra.mxu0 0.0
    %362 = vmatprep.subr.mxu0 0.0
    %363 = vmatpush1.msra.mxu0 0.0
    %364 = vmatprep.subr.mxu0 0.0
    %365 = vmatpush1.msra.mxu0 0.0
    %366 = vmatprep.subr.mxu0 0.0
    %367 = vmatpush1.msra.mxu0 0.0
    %368 = vmatprep.subr.mxu0 0.0
    %369 = vmatpush1.msra.mxu0 0.0
    %370 = vmatprep.subr.mxu0 0.0
    %371 = vmatpush1.msra.mxu0 0.0
    %372 = vmatprep.subr.mxu0 0.0
    %373 = vmatpush1.msra.mxu0 0.0
    %374 = vmatprep.subr.mxu0 0.0
    %375 = vmatpush1.msra.mxu0 0.0
    %376 = vmatprep.subr.mxu0 0.0
    %377 = vmatpush1.msra.mxu0 0.0
    %378 = vmatprep.mubr.f32.mxu0 0.0
    %379 = vmatmul.mubr.f32.gmra.mrb[0].mxu0 %v312
    %v380 = vpop.f32.mrb[0].mxu0
    %v381 = vadd.f32 0.0, %v380
    %v382 = vpop.f32.mrb[0].mxu0
    %383 = vdwg.mxu0
    %v384 = vxor.u32 %v381, 2147483648
    %v385 = vmul.f32 %v384, 1.442695
    %v386 = vpow.pop %v385
    %v387 = vadd.f32 %v386, 1.0
    %v388 = vrcp.pop %v387
    %v389 = vmul.f32 1.0, %v388
    %v390 = vmul.f32 %v226, %v389
    %391 = vst.msk [vmem:[#allocation7] sm:$0xff] %vm63, %v390
    // Predicated region
    $region38: #{tpu_custom_call.1} parent=1 // pred_check
      _
    $region39: #{tpu_custom_call.1} parent=1 // pred_check_branch
      %393 = sbr.rel (0) target = $region41
    $region40: #{tpu_custom_call.1} parent=1 // pred_region
      %s395 = ssub.s32 128, 128
      %396 = vsyncadd [#allocation4], %s395
      %s398 = sshll.u32 [#allocation7], 4
      %s399 = int_to_ptr.vmem [resolvable:$true] %s398
      %401 = dma.vmem_to_hbm [thread:$0]  %s399, 128, %s7, [#allocation4]
    $region41: #{tpu_custom_call.1} parent=1 // pred_fallthru
      _
    // Predicated region
    $region42: #{tpu_custom_call.1} parent=1 // pred_check
      _
    $region43: #{tpu_custom_call.1} parent=1 // pred_check_branch
      %403 = sbr.rel (0) target = $region45
    $region44: #{tpu_custom_call.1} parent=1 // pred_region
      %404 = dma.done [#allocation4], 128
    $region45: #{tpu_custom_call.1} parent=1 // pred_fallthru
      _
    %405 = vsyncpa [#allocation3], 1
    %406 = vsyncpa [#allocation6], 1
    %407 = vsyncpa [#allocation4], 1

</llo_original>
